<compile_context>
chip_gen: v7x
topology: tpu7x:2x2x1
jax: 0.10.0
libtpu: 0.0.40
codegen_flags: <defaults>
</compile_context>

<pallas_src>
import functools

import jax
import jax.numpy as jnp
from jax import lax
from jax.experimental import pallas as pl
from jax.experimental.pallas import tpu as pltpu

BN_EPS = 1e-5
_VMEM_LIMIT = 48 * 1024 * 1024  # stays within v7x's 64 MiB physical VMEM with headroom


def _linear_stats_kernel(x_ref, w1_ref, b1_ref, h_ref, sum_ref, sq_ref, *,
                         batch_size, tile_b):
    """Phase 1: h = x @ w1^T + b1; accumulate per-feature sum / sum-of-squares."""
    i = pl.program_id(0)

    # bf16 MXU operands, f32 accumulation.  w1 is (hidden, in_dim): contract in_dim.
    h = lax.dot_general(
        x_ref[...].astype(jnp.bfloat16),
        w1_ref[...].astype(jnp.bfloat16),
        dimension_numbers=(((1,), (1,)), ((), ())),
        preferred_element_type=jnp.float32,
    ) + b1_ref[...]
    h_ref[...] = h

    @pl.when(i == 0)
    def _():
        sum_ref[...] = jnp.zeros_like(sum_ref)
        sq_ref[...] = jnp.zeros_like(sq_ref)

    # Mask rows past the true batch size (possible partial last tile) so they
    # never pollute the BatchNorm statistics.
    row = i * tile_b + lax.broadcasted_iota(jnp.int32, h.shape, 0)
    hv = jnp.where(row < batch_size, h, 0.0)
    sum_ref[...] += jnp.sum(hv, axis=0, keepdims=True)
    sq_ref[...] += jnp.sum(hv * hv, axis=0, keepdims=True)


def _bn_relu_linear_kernel(h_ref, sum_ref, sq_ref, gamma_ref, beta_ref,
                           w2_ref, b2_ref, o_ref, *, batch_size):
    """Phase 2: BatchNorm1d (training-mode batch stats) -> ReLU -> layer2 Linear."""
    inv_n = 1.0 / batch_size
    mean = sum_ref[...] * inv_n
    var = sq_ref[...] * inv_n - mean * mean          # biased variance (PyTorch BN training)
    scale = lax.rsqrt(var + BN_EPS) * gamma_ref[...]
    h = (h_ref[...] - mean) * scale + beta_ref[...]  # f32 BN math
    h = jnp.maximum(h, 0.0)

    # w2 is (out_dim, hidden): contract hidden of both operands on the MXU.
    out = lax.dot_general(
        h.astype(jnp.bfloat16),
        w2_ref[...].astype(jnp.bfloat16),
        dimension_numbers=(((1,), (1,)), ((), ())),
        preferred_element_type=jnp.float32,
    ) + b2_ref[...]
    o_ref[...] = out.astype(o_ref.dtype)


def _pick_batch_tile(batch, target=256):
    if batch <= target:
        return batch
    for tb in (target, 128, 64, 32, 16, 8):
        if batch % tb == 0:
            return tb
    return target  # last tile is partial; the kernel masks it out of the BN stats


def prediction_mlp(x, w1, b1, gamma, beta, w2, b2, *, tile_b=None):
    """x: (B, in_dim); w1: (hidden, in_dim); w2: (out_dim, hidden) — PyTorch layouts."""
    B, in_dim = x.shape
    hidden = w1.shape[0]
    out_dim = w2.shape[0]
    if tile_b is None:
        tile_b = _pick_batch_tile(B)
    n_tiles = pl.cdiv(B, tile_b)

    # Lift 1-D params to (1, dim) rows (lane-major); no weight transposes here.
    b1r = b1.reshape(1, hidden)
    b2r = b2.reshape(1, out_dim)
    gammar = gamma.reshape(1, hidden)
    betar = beta.reshape(1, hidden)

    const = lambda shape: pl.BlockSpec(shape, lambda i: (0,) * len(shape))
    batch_tiled = lambda shape: pl.BlockSpec(shape, lambda i: (i, 0))
    cparams = lambda sem: pltpu.CompilerParams(
        dimension_semantics=(sem,), vmem_limit_bytes=_VMEM_LIMIT)

    # ---- Phase 1: layer1 Linear + BN sum / sum-of-squares accumulation ----
    h, s, sq = pl.pallas_call(
        functools.partial(_linear_stats_kernel, batch_size=B, tile_b=tile_b),
        grid=(n_tiles,),
        in_specs=[
            batch_tiled((tile_b, in_dim)),   # x tile
            const((hidden, in_dim)),         # w1 (VMEM resident)
            const((1, hidden)),              # b1
        ],
        out_specs=(
            batch_tiled((tile_b, hidden)),   # pre-BN h
            const((1, hidden)),              # sum        (accumulator)
            const((1, hidden)),              # sum of sq  (accumulator)
        ),
        out_shape=(
            jax.ShapeDtypeStruct((B, hidden), jnp.float32),
            jax.ShapeDtypeStruct((1, hidden), jnp.float32),
            jax.ShapeDtypeStruct((1, hidden), jnp.float32),
        ),
        compiler_params=cparams("arbitrary"),   # batch axis carries the accumulators
    )(x, w1, b1r)

    # ---- Phase 2: BN normalize + ReLU + layer2 Linear ----
    out = pl.pallas_call(
        functools.partial(_bn_relu_linear_kernel, batch_size=float(B)),
        grid=(n_tiles,),
        in_specs=[
            batch_tiled((tile_b, hidden)),   # h tile
            const((1, hidden)),              # sum
            const((1, hidden)),              # sumsq
            const((1, hidden)),              # gamma
            const((1, hidden)),              # beta
            const((out_dim, hidden)),        # w2 (VMEM resident)
            const((1, out_dim)),             # b2
        ],
        out_specs=batch_tiled((tile_b, out_dim)),
        out_shape=jax.ShapeDtypeStruct((B, out_dim), x.dtype),
        compiler_params=cparams("parallel"),    # independent batch tiles (megacore on v7x)
    )(h, s, sq, gammar, betar, w2, b2r)

    return out


def reference_mlp(x, w1, b1, gamma, beta, w2, b2):
    """Pure-JAX reference with the same bf16-operand / f32-accumulate matmuls."""
    h = jnp.dot(x.astype(jnp.bfloat16), w1.T.astype(jnp.bfloat16),
                preferred_element_type=jnp.float32) + b1
    mean = jnp.mean(h, axis=0, keepdims=True)
    var = jnp.mean((h - mean) ** 2, axis=0, keepdims=True)
    h = (h - mean) * lax.rsqrt(var + BN_EPS)
    h = h * gamma + beta
    h = jnp.maximum(h, 0.0)
    return jnp.dot(h.astype(jnp.bfloat16), w2.T.astype(jnp.bfloat16),
                   preferred_element_type=jnp.float32) + b2


if __name__ == "__main__":
    # Small, forward-consistent shapes: prediction_MLP(out_dim=8, in_dim=32, hidden_dim=16)
    B, IN_DIM, HIDDEN, OUT_DIM = 8, 32, 16, 8

    key = jax.random.PRNGKey(0)
    k_x, k_w1, k_b1, k_w2, k_b2 = jax.random.split(key, 5)

    x = jax.random.normal(k_x, (B, IN_DIM), dtype=jnp.float32)

    # PyTorch Linear parameter shapes: (out, in) weight + (out,) bias.
    lim1 = 1.0 / jnp.sqrt(IN_DIM)
    w1 = jax.random.uniform(k_w1, (HIDDEN, IN_DIM), minval=-lim1, maxval=lim1, dtype=jnp.float32)
    b1 = jax.random.uniform(k_b1, (HIDDEN,), minval=-lim1, maxval=lim1, dtype=jnp.float32)
    lim2 = 1.0 / jnp.sqrt(HIDDEN)
    w2 = jax.random.uniform(k_w2, (OUT_DIM, HIDDEN), minval=-lim2, maxval=lim2, dtype=jnp.float32)
    b2 = jax.random.uniform(k_b2, (OUT_DIM,), minval=-lim2, maxval=lim2, dtype=jnp.float32)
    gamma = jnp.ones((HIDDEN,), dtype=jnp.float32)   # BatchNorm1d weight init
    beta = jnp.zeros((HIDDEN,), dtype=jnp.float32)   # BatchNorm1d bias init

    out = jax.block_until_ready(prediction_mlp(x, w1, b1, gamma, beta, w2, b2))
    ref = jax.block_until_ready(reference_mlp(x, w1, b1, gamma, beta, w2, b2))

    assert out.shape == (B, OUT_DIM)
    assert jnp.allclose(out, ref, atol=5e-3, rtol=5e-3), float(jnp.max(jnp.abs(out - ref)))

    print("KERNEL_OK")
</pallas_src>

<mosaic_0001>
module attributes {stable_mosaic.version = 11 : i64} {
  func.func @_linear_stats_kernel(%arg0: i32, %arg1: memref<8x32xf32, #tpu.memory_space<vmem>>, %arg2: memref<16x32xf32, #tpu.memory_space<vmem>>, %arg3: memref<1x16xf32, #tpu.memory_space<vmem>>, %arg4: memref<8x16xf32, #tpu.memory_space<vmem>>, %arg5: memref<1x16xf32, #tpu.memory_space<vmem>>, %arg6: memref<1x16xf32, #tpu.memory_space<vmem>>) attributes {dimension_semantics = [#tpu.dimension_semantics<arbitrary>], iteration_bounds = array<i64: 1>, scalar_prefetch = 0 : i64, scratch_operands = 0 : i64, tpu.core_type = #tpu.core_type<tc>, window_params = [{transform_indices = @transform_0, window_bounds = array<i64: 8, 32>}, {pipeline_mode = #tpu.pipeline_mode<synchronous>, transform_indices = @transform_1, window_bounds = array<i64: 16, 32>}, {pipeline_mode = #tpu.pipeline_mode<synchronous>, transform_indices = @transform_2, window_bounds = array<i64: 1, 16>}, {transform_indices = @transform_3, window_bounds = array<i64: 8, 16>}, {pipeline_mode = #tpu.pipeline_mode<synchronous>, transform_indices = @transform_4, window_bounds = array<i64: 1, 16>}, {pipeline_mode = #tpu.pipeline_mode<synchronous>, transform_indices = @transform_5, window_bounds = array<i64: 1, 16>}]} {
    %c0 = arith.constant 0 : index
    %c0_0 = arith.constant 0 : index
    %0 = vector.load %arg1[%c0, %c0_0] : memref<8x32xf32, #tpu.memory_space<vmem>>, vector<8x32xf32>
    %1 = arith.truncf %0 : vector<8x32xf32> to vector<8x32xbf16>
    %c0_1 = arith.constant 0 : index
    %c0_2 = arith.constant 0 : index
    %2 = vector.load %arg2[%c0_1, %c0_2] : memref<16x32xf32, #tpu.memory_space<vmem>>, vector<16x32xf32>
    %3 = arith.truncf %2 : vector<16x32xf32> to vector<16x32xbf16>
    %cst = arith.constant dense<0.000000e+00> : vector<8x16xf32>
    %4 = tpu.matmul %1, %3, %cst {dimension_numbers = #tpu.dot_dimension_numbers<[1], [1], [0], [0], [0, 0, 1, 0], [], []>} : vector<8x32xbf16>, vector<16x32xbf16>, vector<8x16xf32> -> vector<8x16xf32>
    %c0_3 = arith.constant 0 : index
    %c0_4 = arith.constant 0 : index
    %5 = vector.load %arg3[%c0_3, %c0_4] : memref<1x16xf32, #tpu.memory_space<vmem>>, vector<1x16xf32>
    %6 = vector.broadcast %5 : vector<1x16xf32> to vector<8x16xf32>
    %7 = arith.addf %4, %6 : vector<8x16xf32>
    %c0_5 = arith.constant 0 : index
    %c0_6 = arith.constant 0 : index
    %8 = vector.load %arg4[%c0_5, %c0_6] : memref<8x16xf32, #tpu.memory_space<vmem>>, vector<8x16xf32>
    tpu.vector_store %arg4[%c0_5, %c0_6], %7 {strides = array<i32>} : memref<8x16xf32, #tpu.memory_space<vmem>>, vector<8x16xf32>,
    %c0_i32 = arith.constant 0 : i32
    %9 = arith.cmpi eq, %arg0, %c0_i32 : i32
    %10 = arith.extui %9 : i1 to i32
    %c0_i32_7 = arith.constant 0 : i32
    %11 = arith.cmpi ne, %10, %c0_i32_7 : i32
    scf.if %11 {
      %cst_20 = arith.constant 0.000000e+00 : f32
      %31 = vector.broadcast %cst_20 : f32 to vector<1x16xf32>
      %c0_21 = arith.constant 0 : index
      %c0_22 = arith.constant 0 : index
      %32 = vector.load %arg5[%c0_21, %c0_22] : memref<1x16xf32, #tpu.memory_space<vmem>>, vector<1x16xf32>
      tpu.vector_store %arg5[%c0_21, %c0_22], %31 {strides = array<i32>} : memref<1x16xf32, #tpu.memory_space<vmem>>, vector<1x16xf32>,
      %cst_23 = arith.constant 0.000000e+00 : f32
      %33 = vector.broadcast %cst_23 : f32 to vector<1x16xf32>
      %c0_24 = arith.constant 0 : index
      %c0_25 = arith.constant 0 : index
      %34 = vector.load %arg6[%c0_24, %c0_25] : memref<1x16xf32, #tpu.memory_space<vmem>>, vector<1x16xf32>
      tpu.vector_store %arg6[%c0_24, %c0_25], %33 {strides = array<i32>} : memref<1x16xf32, #tpu.memory_space<vmem>>, vector<1x16xf32>,
    } else {
    }
    %c8_i32 = arith.constant 8 : i32
    %12 = arith.muli %arg0, %c8_i32 : i32
    %13 = tpu.iota {dimensions = array<i32: 0>} : vector<8x16xi32>
    %14 = vector.broadcast %12 : i32 to vector<8x16xi32>
    %15 = arith.addi %14, %13 : vector<8x16xi32>
    %c8_i32_8 = arith.constant 8 : i32
    %16 = vector.broadcast %c8_i32_8 : i32 to vector<8x16xi32>
    %17 = arith.cmpi slt, %15, %16 : vector<8x16xi32>
    %cst_9 = arith.constant 0.000000e+00 : f32
    %18 = vector.broadcast %cst_9 : f32 to vector<8x16xf32>
    %19 = arith.select %17, %7, %18 : vector<8x16xi1>, vector<8x16xf32>
    %c0_10 = arith.constant 0 : index
    %c0_11 = arith.constant 0 : index
    %20 = vector.load %arg5[%c0_10, %c0_11] : memref<1x16xf32, #tpu.memory_space<vmem>>, vector<1x16xf32>
    %cst_12 = arith.constant dense<0.000000e+00> : vector<16xf32>
    %21 = vector.multi_reduction <add>, %19, %cst_12 [0] : vector<8x16xf32> to vector<16xf32>
    %22 = vector.shape_cast %21 : vector<16xf32> to vector<1x16xf32>
    %23 = arith.addf %20, %22 : vector<1x16xf32>
    %c0_13 = arith.constant 0 : index
    %c0_14 = arith.constant 0 : index
    %24 = vector.load %arg5[%c0_13, %c0_14] : memref<1x16xf32, #tpu.memory_space<vmem>>, vector<1x16xf32>
    tpu.vector_store %arg5[%c0_13, %c0_14], %23 {strides = array<i32>} : memref<1x16xf32, #tpu.memory_space<vmem>>, vector<1x16xf32>,
    %c0_15 = arith.constant 0 : index
    %c0_16 = arith.constant 0 : index
    %25 = vector.load %arg6[%c0_15, %c0_16] : memref<1x16xf32, #tpu.memory_space<vmem>>, vector<1x16xf32>
    %26 = arith.mulf %19, %19 : vector<8x16xf32>
    %cst_17 = arith.constant dense<0.000000e+00> : vector<16xf32>
    %27 = vector.multi_reduction <add>, %26, %cst_17 [0] : vector<8x16xf32> to vector<16xf32>
    %28 = vector.shape_cast %27 : vector<16xf32> to vector<1x16xf32>
    %29 = arith.addf %25, %28 : vector<1x16xf32>
    %c0_18 = arith.constant 0 : index
    %c0_19 = arith.constant 0 : index
    %30 = vector.load %arg6[%c0_18, %c0_19] : memref<1x16xf32, #tpu.memory_space<vmem>>, vector<1x16xf32>
    tpu.vector_store %arg6[%c0_18, %c0_19], %29 {strides = array<i32>} : memref<1x16xf32, #tpu.memory_space<vmem>>, vector<1x16xf32>,
    return
  }
  func.func @transform_0(%arg0: i32) -> (i32, i32) {
    %c0_i32 = arith.constant 0 : i32
    %c0_i32_0 = arith.constant 0 : i32
    return %arg0, %c0_i32 : i32, i32
  }
  func.func @transform_1(%arg0: i32) -> (i32, i32) {
    %c0_i32 = arith.constant 0 : i32
    %c0_i32_0 = arith.constant 0 : i32
    %c0_i32_1 = arith.constant 0 : i32
    return %c0_i32, %c0_i32_0 : i32, i32
  }
  func.func @transform_2(%arg0: i32) -> (i32, i32) {
    %c0_i32 = arith.constant 0 : i32
    %c0_i32_0 = arith.constant 0 : i32
    %c0_i32_1 = arith.constant 0 : i32
    return %c0_i32, %c0_i32_0 : i32, i32
  }
  func.func @transform_3(%arg0: i32) -> (i32, i32) {
    %c0_i32 = arith.constant 0 : i32
    %c0_i32_0 = arith.constant 0 : i32
    return %arg0, %c0_i32 : i32, i32
  }
  func.func @transform_4(%arg0: i32) -> (i32, i32) {
    %c0_i32 = arith.constant 0 : i32
    %c0_i32_0 = arith.constant 0 : i32
    %c0_i32_1 = arith.constant 0 : i32
    return %c0_i32, %c0_i32_0 : i32, i32
  }
  func.func @transform_5(%arg0: i32) -> (i32, i32) {
    %c0_i32 = arith.constant 0 : i32
    %c0_i32_0 = arith.constant 0 : i32
    %c0_i32_1 = arith.constant 0 : i32
    return %c0_i32, %c0_i32_0 : i32, i32
  }
}

</mosaic_0001>

<llo_original>
// kernel: tpu_custom_call.1
$region0: #{tpu_custom_call.1}
  #allocation0 [shape = 'u32[]', space=smem, size = 0x4, offset = 0x4, fixed_abs, tag = 'smem constant byte address 0x4 - core index']
  #allocation1 [shape = 'u32[144,128]{1,0:T(1,128)}', space=vmem, size = 0x12000, scoped, tag = 'internal scratch']
  %s0 = inlined_call_operand.hbm [shape: f32[8,32], index: 0, kind: input, shape index: {}]
  %s1 = inlined_call_operand.hbm [shape: f32[16,32], index: 1, kind: input, shape index: {}]
  %s2 = inlined_call_operand.vmem [shape: f32[1,16], index: 2, kind: input, shape index: {}]
  %s3 = inlined_call_operand.hbm [shape: f32[8,16], index: 3, kind: output, shape index: {0}]
  %s4 = inlined_call_operand.hbm [shape: f32[1,16], index: 4, kind: output, shape index: {1}]
  %s5 = inlined_call_operand.hbm [shape: f32[1,16], index: 5, kind: output, shape index: {2}]
  %6 = xla_tuple %s3, %s4, %s5
  %s7 = sld [smem:[#allocation0]]
  $region50: #{tpu_custom_call.1} parent=0
    _
  %s9 = ssub.s32 1, %s7
  %s10 = scalar_select 0, %s9, %s7
  $region1: #{tpu_custom_call.1} parent=0
    #allocation2 [shape = 'u8[4096]{0}', space=vmem, size = 0x1000, scoped, tag = 'input window, operand 0, single buffered']
    #allocation3 [shape = 's32[1]{0}', space=sflag, size = 0x4, scoped, tag = 'scoped memory for tpu_custom_call.1']
    #allocation4 [shape = 's32[1]{0}', space=sflag, size = 0x4, scoped, tag = 'scoped memory for tpu_custom_call.1']
    #allocation5 [shape = 'u8[8192]{0}', space=vmem, size = 0x2000, scoped, tag = 'input window, operand 1, single buffered']
    #allocation6 [shape = 's32[1]{0}', space=sflag, size = 0x4, scoped, tag = 'scoped memory for tpu_custom_call.1']
    #allocation7 [shape = 'u8[4096]{0}', space=vmem, size = 0x1000, scoped, tag = 'output window, operand 0, single buffered']
    #allocation8 [shape = 'u8[512]{0}', space=vmem, size = 0x400, scoped, tag = 'output window, operand 1, single buffered']
    #allocation9 [shape = 's32[1]{0}', space=sflag, size = 0x4, scoped, tag = 'scoped memory for tpu_custom_call.1']
    #allocation10 [shape = 'u8[512]{0}', space=vmem, size = 0x400, scoped, tag = 'output window, operand 2, single buffered']
    %11 = vsyncpa [#allocation3], 0
    %12 = vsyncpa [#allocation6], 0
    %13 = vsyncpa [#allocation4], 0
    %14 = vsyncpa [#allocation9], 0
    // Predicated region
    $region2: #{tpu_custom_call.1} parent=1 // pred_check
      _
    $region3: #{tpu_custom_call.1} parent=1 // pred_check_branch
      %16 = sbr.rel (0) target = $region5
    $region4: #{tpu_custom_call.1} parent=1 // pred_region
      %s18 = ssub.s32 128, 128
      %19 = vsyncadd [#allocation3], %s18
      %s21 = sshll.u32 [#allocation2], 4
      %s22 = int_to_ptr.vmem [resolvable:$true] %s21
      %24 = dma.hbm_to_vmem [thread:$0]  %s0, 128, %s22, [#allocation3]
    $region5: #{tpu_custom_call.1} parent=1 // pred_fallthru
      _
    // Predicated region
    $region6: #{tpu_custom_call.1} parent=1 // pred_check
      _
    $region7: #{tpu_custom_call.1} parent=1 // pred_check_branch
      %26 = sbr.rel (0) target = $region9
    $region8: #{tpu_custom_call.1} parent=1 // pred_region
      %s28 = ssub.s32 256, 256
      %29 = vsyncadd [#allocation6], %s28
      %s30 = sshll.u32 [#allocation5], 4
      %s31 = int_to_ptr.vmem [resolvable:$true] %s30
      %36 = dma.hbm_to_vmem [thread:$0]  %s1, 256, %s31, [#allocation6], 128, 128, 8
    $region9: #{tpu_custom_call.1} parent=1 // pred_fallthru
      _
    // Predicated region
    $region10: #{tpu_custom_call.1} parent=1 // pred_check
      _
    $region11: #{tpu_custom_call.1} parent=1 // pred_check_branch
      %38 = sbr.rel (0) target = $region13
    $region12: #{tpu_custom_call.1} parent=1 // pred_region
      _
    $region13: #{tpu_custom_call.1} parent=1 // pred_fallthru
      _
    // Predicated region
    $region14: #{tpu_custom_call.1} parent=1 // pred_check
      _
    $region15: #{tpu_custom_call.1} parent=1 // pred_check_branch
      %40 = sbr.rel (0) target = $region17
    $region16: #{tpu_custom_call.1} parent=1 // pred_region
      %41 = dma.done [#allocation3], 128
    $region17: #{tpu_custom_call.1} parent=1 // pred_fallthru
      _
    // Predicated region
    $region18: #{tpu_custom_call.1} parent=1 // pred_check
      _
    $region19: #{tpu_custom_call.1} parent=1 // pred_check_branch
      %43 = sbr.rel (0) target = $region21
    $region20: #{tpu_custom_call.1} parent=1 // pred_region
      %44 = dma.done [#allocation6], 256
    $region21: #{tpu_custom_call.1} parent=1 // pred_fallthru
      _
    %v46 = vld [vmem:[#allocation2] sm:$0xff]
    %v47 = vpack.c.bf16 %v46, %v46
    %v48 = vld [vmem:[#allocation5] sm:$0xff]
    %v49 = vld [vmem:[#allocation5 + $0x8] sm:$0xff]
    %v50 = vpack.c.bf16 %v49, %v48
    %v51 = vld [vmem:[%s2] sm:$0x1]
    %v53 = vlaneseq
    %v54 = vshrl.u32 %v53, 7
    %v55 = vsub.s32 0, %v54
    %v56 = vrot.slane %v51, %v55
    %vm58 = vcmask 261120
    %v60 = vsel %vm58, %v47, 0
    %v63 = vsel %vm58, %v50, 0
    %65 = vmatprep.subr.bf16.mxu0 0
    %66 = vmatpush1.bf16.xpose.msra.mxu0 %v63
    %67 = vmatprep.subr.bf16.mxu0 0
    %68 = vmatpush1.bf16.xpose.msra.mxu0 0
    %69 = vmatprep.subr.bf16.mxu0 0
    %70 = vmatpush1.bf16.xpose.msra.mxu0 0
    %71 = vmatprep.subr.bf16.mxu0 0
    %72 = vmatpush1.bf16.xpose.msra.mxu0 0
    %73 = vmatprep.subr.bf16.mxu0 0
    %74 = vmatpush1.bf16.xpose.msra.mxu0 0
    %75 = vmatprep.subr.bf16.mxu0 0
    %76 = vmatpush1.bf16.xpose.msra.mxu0 0
    %77 = vmatprep.subr.bf16.mxu0 0
    %78 = vmatpush1.bf16.xpose.msra.mxu0 0
    %79 = vmatprep.subr.bf16.mxu0 0
    %80 = vmatpush1.bf16.xpose.msra.mxu0 0
    %81 = vmatprep.subr.bf16.mxu0 0
    %82 = vmatpush1.bf16.xpose.msra.mxu0 0
    %83 = vmatprep.subr.bf16.mxu0 0
    %84 = vmatpush1.bf16.xpose.msra.mxu0 0
    %85 = vmatprep.subr.bf16.mxu0 0
    %86 = vmatpush1.bf16.xpose.msra.mxu0 0
    %87 = vmatprep.subr.bf16.mxu0 0
    %88 = vmatpush1.bf16.xpose.msra.mxu0 0
    %89 = vmatprep.subr.bf16.mxu0 0
    %90 = vmatpush1.bf16.xpose.msra.mxu0 0
    %91 = vmatprep.subr.bf16.mxu0 0
    %92 = vmatpush1.bf16.xpose.msra.mxu0 0
    %93 = vmatprep.subr.bf16.mxu0 0
    %94 = vmatpush1.bf16.xpose.msra.mxu0 0
    %95 = vmatprep.subr.bf16.mxu0 0
    %96 = vmatpush1.bf16.xpose.msra.mxu0 0
    %97 = vmatprep.mubr.bf16.mxu0 0
    %98 = vmatmul.mubr.bf16.gmra.mrb[0].mxu0 %v60
    %v99 = vpop.f32.mrb[0].mxu0
    %v100 = vadd.f32 %v56, %v99
    %v101 = vpop.f32.mrb[0].mxu0
    %v102 = vpop.f32.mrb[0].mxu0
    %v103 = vpop.f32.mrb[0].mxu0
    %104 = vdwg.mxu0
    %vm105 = vcmask 130048
    %106 = vst.msk [vmem:[#allocation7] sm:$0xff] %vm105, %v100
    %p107 = scmp.eq.s32.totalorder 0, 0
    // Predicated region
    $region22: #{tpu_custom_call.1} parent=1 // pred_check
      %p108 = pneg %p107
    $region23: #{tpu_custom_call.1} parent=1 // pred_check_branch
      %110 = sbr.rel (%p108) target = $region25
    $region24: #{tpu_custom_call.1} parent=1 // pred_region
      %vm111 = vcmask 122880
      %112 = vst.msk [vmem:[#allocation8] sm:$0x1] %vm111, 0.0
      %113 = vst.msk [vmem:[#allocation10] sm:$0x1] %vm111, 0.0
    $region25: #{tpu_custom_call.1} parent=1 // pred_fallthru
      _
    %s114 = smul.u32 0, 8
    %v115 = vlaneseq
    %v116 = vshrl.u32 %v115, 7
    %v117 = vstv %s114
    %v118 = vadd.s32 %v117, %v116
    %vm119 = vcmp.lt.s32.totalorder %v118, 8
    %v120 = vsel %vm119, %v100, 0.0
    %v121 = vld [vmem:[#allocation8] sm:$0x1]
    %v122 = vsel %vm105, %v120, 0.0
    %v123 = vrot.slane %v122, 4
    %v124 = vadd.f32 %v122, %v123
    %v125 = vrot.slane %v124, 2
    %v126 = vadd.f32 %v124, %v125
    %v127 = vrot.slane %v126, 1
    %v128 = vadd.f32 %v126, %v127
    %v129 = vadd.f32 %v121, %v128
    %vm130 = vcmask 122880
    %131 = vst.msk [vmem:[#allocation8] sm:$0x1] %vm130, %v129
    %v132 = vld [vmem:[#allocation10] sm:$0x1]
    %v133 = vmul.f32 %v120, %v120
    %v134 = vsel %vm105, %v133, 0.0
    %v135 = vrot.slane %v134, 4
    %v136 = vadd.f32 %v134, %v135
    %v137 = vrot.slane %v136, 2
    %v138 = vadd.f32 %v136, %v137
    %v139 = vrot.slane %v138, 1
    %v140 = vadd.f32 %v138, %v139
    %v141 = vadd.f32 %v132, %v140
    %142 = vst.msk [vmem:[#allocation10] sm:$0x1] %vm130, %v141
    // Predicated region
    $region26: #{tpu_custom_call.1} parent=1 // pred_check
      _
    $region27: #{tpu_custom_call.1} parent=1 // pred_check_branch
      %144 = sbr.rel (0) target = $region29
    $region28: #{tpu_custom_call.1} parent=1 // pred_region
      %s146 = ssub.s32 128, 128
      %147 = vsyncadd [#allocation4], %s146
      %s149 = sshll.u32 [#allocation7], 4
      %s150 = int_to_ptr.vmem [resolvable:$true] %s149
      %152 = dma.vmem_to_hbm [thread:$0]  %s150, 128, %s3, [#allocation4]
    $region29: #{tpu_custom_call.1} parent=1 // pred_fallthru
      _
    // Predicated region
    $region30: #{tpu_custom_call.1} parent=1 // pred_check
      _
    $region31: #{tpu_custom_call.1} parent=1 // pred_check_branch
      %154 = sbr.rel (0) target = $region33
    $region32: #{tpu_custom_call.1} parent=1 // pred_region
      %s156 = ssub.s32 16, 16
      %157 = vsyncadd [#allocation9], %s156
      %s159 = sshll.u32 [#allocation8], 4
      %s160 = int_to_ptr.vmem [resolvable:$true] %s159
      %162 = dma.vmem_to_hbm [thread:$0]  %s160, 16, %s4, [#allocation9]
    $region33: #{tpu_custom_call.1} parent=1 // pred_fallthru
      _
    // Predicated region
    $region34: #{tpu_custom_call.1} parent=1 // pred_check
      _
    $region35: #{tpu_custom_call.1} parent=1 // pred_check_branch
      %164 = sbr.rel (0) target = $region37
    $region36: #{tpu_custom_call.1} parent=1 // pred_region
      %s166 = ssub.s32 16, 16
      %167 = vsyncadd [#allocation9], %s166
      %s169 = sshll.u32 [#allocation10], 4
      %s170 = int_to_ptr.vmem [resolvable:$true] %s169
      %172 = dma.vmem_to_hbm [thread:$0]  %s170, 16, %s5, [#allocation9]
    $region37: #{tpu_custom_call.1} parent=1 // pred_fallthru
      _
    // Predicated region
    $region38: #{tpu_custom_call.1} parent=1 // pred_check
      _
    $region39: #{tpu_custom_call.1} parent=1 // pred_check_branch
      %174 = sbr.rel (0) target = $region41
    $region40: #{tpu_custom_call.1} parent=1 // pred_region
      %175 = dma.done [#allocation4], 128
    $region41: #{tpu_custom_call.1} parent=1 // pred_fallthru
      _
    // Predicated region
    $region42: #{tpu_custom_call.1} parent=1 // pred_check
      _
    $region43: #{tpu_custom_call.1} parent=1 // pred_check_branch
      %177 = sbr.rel (0) target = $region45
    $region44: #{tpu_custom_call.1} parent=1 // pred_region
      %178 = dma.done [#allocation9], 16
    $region45: #{tpu_custom_call.1} parent=1 // pred_fallthru
      _
    // Predicated region
    $region46: #{tpu_custom_call.1} parent=1 // pred_check
      _
    $region47: #{tpu_custom_call.1} parent=1 // pred_check_branch
      %180 = sbr.rel (0) target = $region49
    $region48: #{tpu_custom_call.1} parent=1 // pred_region
      %181 = dma.done [#allocation9], 16
    $region49: #{tpu_custom_call.1} parent=1 // pred_fallthru
      _
    %182 = vsyncpa [#allocation3], 1
    %183 = vsyncpa [#allocation6], 1
    %184 = vsyncpa [#allocation4], 1
    %185 = vsyncpa [#allocation9], 1

</llo_original>
